<compile_context>
chip_gen: v5e
topology: v5e:2x2
jax: 0.10.0
libtpu: 0.0.40
codegen_flags: <defaults>
</compile_context>

<pallas_src>
import functools
import math

import jax
import jax.numpy as jnp
from jax.experimental import pallas as pl
from jax.experimental.pallas import tpu as pltpu

D_MODEL = 32
MAX_LEN = 85
DROPOUT_P = 0.2
# P(bits >= threshold) = 1 - p  for uniform uint32 bits.
_KEEP_THRESHOLD = int(round(DROPOUT_P * float(2 ** 32)))


# ---------------------------------------------------------------------------
# Parameter setup (glue, plain JAX): sinusoidal positional-encoding buffer.
# ---------------------------------------------------------------------------
def make_pe(d_model: int, max_len: int) -> jnp.ndarray:
    """Sinusoidal PE buffer, shape (max_len, 1, d_model) — matches the torch buffer."""
    position = jnp.arange(0, max_len, dtype=jnp.float32)[:, None]            # (L, 1)
    div_term = jnp.exp(
        jnp.arange(0, d_model, 2, dtype=jnp.float32) * (-math.log(10000.0) / d_model)
    )                                                                        # (D/2,)
    args = position * div_term                                               # (L, D/2)
    pe = jnp.stack([jnp.sin(args), jnp.cos(args)], axis=-1).reshape(max_len, d_model)
    return pe[:, None, :]                                                    # (L, 1, D)


def flatten_pe_for_batch(pe: jnp.ndarray, batch: int) -> jnp.ndarray:
    """Pre-tile pe over the batch so row s matches a flattened (S, B*D) x row s.

    One-time setup (like register_buffer): (MAX_LEN, 1, D) -> (MAX_LEN, B*D).
    """
    return jnp.tile(pe[:, 0, :], (1, batch))


# ---------------------------------------------------------------------------
# Pallas kernels (hot path).
# ---------------------------------------------------------------------------
def pe_add_kernel(x_ref, pe_ref, o_ref):
    # eval-mode forward: x + pe (dropout is identity)
    o_ref[...] = x_ref[...] + pe_ref[...]


def pe_add_dropout_kernel(x_ref, pe_ref, bits_ref, o_ref):
    # training-mode forward: dropout(x + pe, p) with inverted-dropout scaling.
    y = x_ref[...] + pe_ref[...]
    keep = bits_ref[...] >= jnp.uint32(_KEEP_THRESHOLD)      # uint compare, P(keep)=1-p
    scale = 1.0 / (1.0 - DROPOUT_P)
    o_ref[...] = jnp.where(keep, y * scale, 0.0).astype(o_ref.dtype)


# ---------------------------------------------------------------------------
# Wrapper
# ---------------------------------------------------------------------------
def _pick_tile_rows(n_rows: int, row_elems: int, n_operands: int,
                    itemsize: int = 4,
                    vmem_budget_bytes: int = 16 * 1024 * 1024) -> int:
    """Largest sublane-aligned row tile s.t. all double-buffered operands fit the budget."""
    bytes_per_row = row_elems * itemsize * n_operands * 2    # x2: double-buffered
    rows = vmem_budget_bytes // max(bytes_per_row, 1)
    rows = min(rows, n_rows)
    return max(8, (rows // 8) * 8)                           # multiple of 8 sublanes


@functools.partial(jax.jit, static_argnames=("training",))
def positional_encoding(x, pe_flat, key, *, training: bool = False):
    """x: (S, B, D) float32; pe_flat: (MAX_LEN, B*D); key: jax PRNG key."""
    S, B, D = x.shape
    F = B * D
    if S > pe_flat.shape[0]:
        raise ValueError(f"seq_len {S} exceeds max_len {pe_flat.shape[0]}")
    if pe_flat.shape[1] != F:
        raise ValueError("pe_flat was prepared for a different batch / d_model")

    x2 = x.reshape(S, F)                                     # contiguous -> free reshape

    n_operands = 4 if training else 3                        # x, pe, (bits,) out
    tile_s = _pick_tile_rows(S, F, n_operands)
    grid = (pl.cdiv(S, tile_s),)
    row_spec = pl.BlockSpec((tile_s, F), lambda i: (i, 0))
    cparams = pltpu.CompilerParams(
        dimension_semantics=("parallel",),                   # independent row tiles
        vmem_limit_bytes=32 * 1024 * 1024,                   # safe on v5e/v6e/v7x
    )

    if training:
        bits = jax.random.bits(key, (S, F), dtype=jnp.uint32)
        out2 = pl.pallas_call(
            pe_add_dropout_kernel,
            out_shape=jax.ShapeDtypeStruct((S, F), x.dtype),
            grid=grid,
            in_specs=[row_spec, row_spec, row_spec],
            out_specs=row_spec,
            compiler_params=cparams,
        )(x2, pe_flat, bits)
    else:
        out2 = pl.pallas_call(
            pe_add_kernel,
            out_shape=jax.ShapeDtypeStruct((S, F), x.dtype),
            grid=grid,
            in_specs=[row_spec, row_spec],
            out_specs=row_spec,
            compiler_params=cparams,
        )(x2, pe_flat)

    return out2.reshape(S, B, D)


if __name__ == "__main__":
    S, B, D = 8, 2, D_MODEL                                  # seq=8, batch=2, d_model=32

    key = jax.random.PRNGKey(0)
    k_x, k_drop = jax.random.split(key)
    x = jax.random.normal(k_x, (S, B, D), dtype=jnp.float32)

    pe = make_pe(D_MODEL, MAX_LEN)                           # (MAX_LEN, 1, D) buffer
    pe_flat = flatten_pe_for_batch(pe, B)                    # (MAX_LEN, B*D) lane-dense

    # --- eval mode (dropout = identity): check against plain-JAX reference ---
    out_eval = jax.block_until_ready(
        positional_encoding(x, pe_flat, k_drop, training=False))
    ref = x + pe[:S]
    assert out_eval.shape == (S, B, D)
    assert jnp.allclose(out_eval, ref, atol=1e-6), "eval-mode mismatch"

    # --- training mode: dropout(x + pe, p=0.2) ---
    out_train = jax.block_until_ready(
        positional_encoding(x, pe_flat, k_drop, training=True))
    assert out_train.shape == (S, B, D)
    scale = 1.0 / (1.0 - DROPOUT_P)
    kept_ok = jnp.abs(out_train - ref * scale) < 1e-5
    dropped = out_train == 0.0
    assert bool(jnp.all(kept_ok | dropped)), "training-mode values are not kept*scale or 0"
    drop_frac = float(jnp.mean(dropped.astype(jnp.float32)))
    assert 0.0 <= drop_frac <= 0.6, f"implausible dropout fraction {drop_frac}"

    print("KERNEL_OK")
</pallas_src>

<mosaic_0001>
module attributes {stable_mosaic.version = 11 : i64} {
  func.func @pe_add_kernel(%arg0: i32, %arg1: memref<8x64xf32, #tpu.memory_space<vmem>>, %arg2: memref<8x64xf32, #tpu.memory_space<vmem>>, %arg3: memref<8x64xf32, #tpu.memory_space<vmem>>) attributes {dimension_semantics = [#tpu.dimension_semantics<parallel>], iteration_bounds = array<i64: 1>, scalar_prefetch = 0 : i64, scratch_operands = 0 : i64, tpu.core_type = #tpu.core_type<tc>, window_params = [{transform_indices = @transform_0, window_bounds = array<i64: 8, 64>}, {transform_indices = @transform_1, window_bounds = array<i64: 8, 64>}, {transform_indices = @transform_2, window_bounds = array<i64: 8, 64>}]} {
    %c0 = arith.constant 0 : index
    %c0_0 = arith.constant 0 : index
    %0 = vector.load %arg1[%c0, %c0_0] : memref<8x64xf32, #tpu.memory_space<vmem>>, vector<8x64xf32>
    %c0_1 = arith.constant 0 : index
    %c0_2 = arith.constant 0 : index
    %1 = vector.load %arg2[%c0_1, %c0_2] : memref<8x64xf32, #tpu.memory_space<vmem>>, vector<8x64xf32>
    %2 = arith.addf %0, %1 : vector<8x64xf32>
    %c0_3 = arith.constant 0 : index
    %c0_4 = arith.constant 0 : index
    %3 = vector.load %arg3[%c0_3, %c0_4] : memref<8x64xf32, #tpu.memory_space<vmem>>, vector<8x64xf32>
    tpu.vector_store %arg3[%c0_3, %c0_4], %2 {strides = array<i32>} : memref<8x64xf32, #tpu.memory_space<vmem>>, vector<8x64xf32>,
    return
  }
  func.func @transform_0(%arg0: i32) -> (i32, i32) {
    %c0_i32 = arith.constant 0 : i32
    %c0_i32_0 = arith.constant 0 : i32
    return %arg0, %c0_i32 : i32, i32
  }
  func.func @transform_1(%arg0: i32) -> (i32, i32) {
    %c0_i32 = arith.constant 0 : i32
    %c0_i32_0 = arith.constant 0 : i32
    return %arg0, %c0_i32 : i32, i32
  }
  func.func @transform_2(%arg0: i32) -> (i32, i32) {
    %c0_i32 = arith.constant 0 : i32
    %c0_i32_0 = arith.constant 0 : i32
    return %arg0, %c0_i32 : i32, i32
  }
}

</mosaic_0001>

<llo_original>
// kernel: positional_encoding.1
$region0: #{positional_encoding.1}
  #allocation0 [shape = 'u32[]', space=smem, size = 0x4, offset = 0x4, fixed_abs, tag = 'smem constant byte address 0x4 - core index']
  #allocation1 [shape = 'u32[72,128]{1,0:T(1,128)}', space=vmem, size = 0x9000, scoped, tag = 'internal scratch']
  %s0 = inlined_call_operand.vmem [shape: f32[8,64], index: 0, kind: input, shape index: {}]
  %s1 = inlined_call_operand.vmem [shape: f32[85,64], index: 1, kind: input, shape index: {}]
  %s2 = inlined_call_operand.vmem [shape: f32[8,64], index: 2, kind: output, shape index: {}]
  %s3 = sld [smem:[#allocation0]]
  $region18: #{positional_encoding.1} parent=0
    _
  %s5 = ssub.s32 1, %s3
  %s6 = scalar_select 0, %s5, %s3
  // Predicated region
  $region2: #{positional_encoding.1} parent=0 // pred_check
    _
  $region3: #{positional_encoding.1} parent=0 // pred_check_branch
    %8 = sbr.rel (0) target = $region5
  $region4: #{positional_encoding.1} parent=0 // pred_region
    _
  $region5: #{positional_encoding.1} parent=0 // pred_fallthru
    _
  // Predicated region
  $region6: #{positional_encoding.1} parent=0 // pred_check
    _
  $region7: #{positional_encoding.1} parent=0 // pred_check_branch
    %10 = sbr.rel (0) target = $region9
  $region8: #{positional_encoding.1} parent=0 // pred_region
    _
  $region9: #{positional_encoding.1} parent=0 // pred_fallthru
    _
  %v11 = vld [vmem:[%s0] sm:$0xff]
  %v12 = vld [vmem:[%s1] sm:$0xff]
  %v13 = vadd.f32 %v11, %v12
  %vm14 = vcmask 523264
  %15 = vst.msk [vmem:[%s2] sm:$0xff] %vm14, %v13
  // Predicated region
  $region10: #{positional_encoding.1} parent=0 // pred_check
    _
  $region11: #{positional_encoding.1} parent=0 // pred_check_branch
    %17 = sbr.rel (0) target = $region13
  $region12: #{positional_encoding.1} parent=0 // pred_region
    _
  $region13: #{positional_encoding.1} parent=0 // pred_fallthru
    _
  // Predicated region
  $region14: #{positional_encoding.1} parent=0 // pred_check
    _
  $region15: #{positional_encoding.1} parent=0 // pred_check_branch
    %19 = sbr.rel (0) target = $region17
  $region16: #{positional_encoding.1} parent=0 // pred_region
    _
  $region17: #{positional_encoding.1} parent=0 // pred_fallthru
    _

</llo_original>
